<compile_context>
chip_gen: v6e
topology: v6e:2x2x1
jax: 0.10.0
libtpu: 0.0.40
codegen_flags: <defaults>
</compile_context>

<pallas_src>
import jax
import jax.numpy as jnp
from jax import lax
from jax.experimental import pallas as pl
from jax.experimental.pallas import tpu as pltpu


def _round_up(x, m):
    return ((x + m - 1) // m) * m


# -----------------------------------------------------------------------------
# Fused projection kernel:
#   emissions = tanh(x @ W_enc + b_enc) @ W_tag_pad + b_tag_pad
# x / W_enc / W_tag are bf16 (MXU), accumulation and tanh in f32.
# The tag axis of W_tag/b_tag/output is pre-padded to a multiple of 128 so the
# output stores are lane-dense.
# -----------------------------------------------------------------------------
def _fused_proj_kernel(x_ref, wenc_ref, benc_ref, wtag_ref, btag_ref, o_ref):
    h = jnp.dot(x_ref[...], wenc_ref[...], preferred_element_type=jnp.float32)
    h = jnp.tanh(h + benc_ref[...])                       # f32 elementwise
    em = jnp.dot(h.astype(wtag_ref.dtype), wtag_ref[...],
                 preferred_element_type=jnp.float32)
    o_ref[...] = em + btag_ref[...]


def fused_projection(x_bf16, wenc_bf16, b_enc, wtag_pad_bf16, btag_pad,
                     tag_num, tm=256):
    """x_bf16: (M, E) bf16 -> emissions (M, tag_num) f32."""
    M, E = x_bf16.shape
    H = wenc_bf16.shape[1]
    Npad = wtag_pad_bf16.shape[1]

    # big row tile (256) for MXU occupancy; cap at the (16-aligned) token count
    # so tiny inputs do not blow up the padded compute.
    tm_eff = min(tm, _round_up(M, 16))
    Mp = _round_up(M, tm_eff)
    if Mp != M:
        x_bf16 = jnp.pad(x_bf16, ((0, Mp - M), (0, 0)))

    out = pl.pallas_call(
        _fused_proj_kernel,
        out_shape=jax.ShapeDtypeStruct((Mp, Npad), jnp.float32),
        grid=(Mp // tm_eff,),
        in_specs=[
            pl.BlockSpec((tm_eff, E), lambda i: (i, 0)),
            pl.BlockSpec((E, H), lambda i: (0, 0)),
            pl.BlockSpec((1, H), lambda i: (0, 0)),
            pl.BlockSpec((H, Npad), lambda i: (0, 0)),
            pl.BlockSpec((1, Npad), lambda i: (0, 0)),
        ],
        out_specs=pl.BlockSpec((tm_eff, Npad), lambda i: (i, 0)),
        compiler_params=pltpu.CompilerParams(dimension_semantics=("parallel",)),
    )(x_bf16, wenc_bf16, b_enc, wtag_pad_bf16, btag_pad)
    return out[:M, :tag_num]


# -----------------------------------------------------------------------------
# CRF kernel (one batch element per grid step):
#   - fully vectorized gold-path score (one-hot masked reduces, no time loop),
#   - merged forward-algorithm + Viterbi recursion (single fori_loop over t,
#     tag dimension handled as one (T,T) broadcast + reduce per timestep),
#   - Viterbi backtrace from a VMEM backpointer scratch.
# Scalar prefetch: lengths (B,) i32.  Padding is assumed to be a suffix
# (matching the reference model's feature copy loop) and lengths >= 1.
# -----------------------------------------------------------------------------
def _crf_kernel(len_ref, em_ref, y_ref, yp_ref, trans_ref, transT_ref,
                start_ref, end_ref, loss_ref, path_ref, bp_ref):
    b = pl.program_id(0)
    S, T = em_ref.shape                      # batch dim squeezed away

    em = em_ref[...]                         # (S, T) f32
    trans = trans_ref[...]                   # (T, T)   trans[i, j] = score(i -> j)
    transT = transT_ref[...]                 # (T, T)   transT[j, i] = trans[i, j]
    start = start_ref[...]                   # (1, T)
    end = end_ref[...]                       # (1, T)
    L = len_ref[b]                           # scalar i32 sequence length

    iota_t = lax.broadcasted_iota(jnp.int32, (1, T), 1)       # tag index (lanes)
    iota_s = lax.broadcasted_iota(jnp.int32, (1, S), 1)       # position (lanes)
    iota_TT = lax.broadcasted_iota(jnp.int32, (T, T), 1)      # prev-tag per row
    iota_st_lane = lax.broadcasted_iota(jnp.int32, (S, T), 1)  # tag per row
    iota_st_sub = lax.broadcasted_iota(jnp.int32, (S, T), 0)   # position per row
    eye = lax.broadcasted_iota(jnp.int32, (T, T), 0) == iota_TT

    def col_to_row(col):
        # (T,1) -> (1,T) without a tiny-shape transpose: keep the diagonal of the
        # broadcast and reduce over sublanes (plain select + axis-0 reduce).
        return jnp.sum(jnp.where(eye, col, jnp.zeros((), col.dtype)),
                       axis=0, keepdims=True)

    # ---------------- gold path score: fully vectorized (no time loop) --------
    y_col = y_ref[...]                        # (S, 1) i32   y[t]
    yp_col = yp_ref[...]                      # (S, 1) i32   y[t-1] (row 0 unused)
    valid_st = iota_st_sub < L                # (S, T) bool
    oh_cur = jnp.where(jnp.logical_and(iota_st_lane == y_col, valid_st),
                       1.0, 0.0)              # (S, T) one-hot of y[t], masked

    # rows of trans selected by the previous tag; one-time static unroll over
    # tags (O(T) selects total, hoisted out of any sequential loop).
    tr_rows = jnp.zeros((S, T), jnp.float32)
    for i in range(T):
        tr_rows = tr_rows + jnp.where(yp_col == i, 1.0, 0.0) * trans[i:i + 1, :]

    gold_em = jnp.sum(oh_cur * em)
    gold_tr = jnp.sum(jnp.where(iota_st_sub >= 1, oh_cur * tr_rows, 0.0))
    gold_st = jnp.sum(jnp.where(iota_st_sub == 0, oh_cur * start, 0.0))
    gold_end = jnp.sum(jnp.where(iota_st_sub == (L - 1), oh_cur * end, 0.0))
    gold = gold_em + gold_tr + gold_st + gold_end

    # ---------------- merged forward (log Z) + Viterbi recursion --------------
    alpha0 = start + em[0:1, :]               # (1, T)
    bp_ref[pl.ds(0, 1), :] = iota_t           # identity backpointers at t = 0

    def step(t, carry):
        alpha, delta = carry                  # (1, T) f32 each
        em_t = em_ref[pl.ds(t, 1), :]         # shared emission row load

        # forward: logsumexp over previous tag (lane axis)
        sc_a = alpha + transT                 # sc_a[j, i] = alpha[i] + trans[i, j]
        m_a = jnp.max(sc_a, axis=-1, keepdims=True)                 # (T, 1)
        lse = m_a + jnp.log(jnp.sum(jnp.exp(sc_a - m_a),
                                    axis=-1, keepdims=True))        # (T, 1)
        new_alpha = col_to_row(lse) + em_t

        # Viterbi: max / argmax over previous tag (lane axis)
        sc_d = delta + transT
        m_d = jnp.max(sc_d, axis=-1, keepdims=True)                 # (T, 1)
        arg = jnp.min(jnp.where(sc_d == m_d, iota_TT, T),
                      axis=-1, keepdims=True)                       # (T, 1) i32
        new_delta = col_to_row(m_d) + em_t
        bp_row = col_to_row(arg)                                    # (1, T) i32

        valid = t < L
        bp_ref[pl.ds(t, 1), :] = jnp.where(valid, bp_row, iota_t)
        alpha = jnp.where(valid, new_alpha, alpha)
        delta = jnp.where(valid, new_delta, delta)
        return alpha, delta

    alpha, delta = lax.fori_loop(1, S, step, (alpha0, alpha0))

    # log partition + NLL
    fin = alpha + end
    mfin = jnp.max(fin)
    log_z = mfin + jnp.log(jnp.sum(jnp.exp(fin - mfin)))
    loss_ref[...] = jnp.reshape(log_z - gold, (1, 1, 1))

    # ---------------- Viterbi backtrace ----------------------------------------
    finv = delta + end
    mv = jnp.max(finv)
    best_last = jnp.min(jnp.where(finv == mv, iota_t, T))
    path0 = jnp.where(iota_s == (L - 1), best_last, 0)     # (1, S) i32

    def back_body(i, carry):
        path, cur = carry
        t = L - 1 - i
        act = t >= 1
        ts = jnp.maximum(t, 1)
        bp_row = bp_ref[pl.ds(ts, 1), :]                    # (1, T)
        prev = jnp.min(jnp.where(iota_t == cur, bp_row, T))
        new_cur = jnp.where(act, prev, cur)
        path = jnp.where(jnp.logical_and(act, iota_s == (t - 1)), new_cur, path)
        return path, new_cur

    path, _ = lax.fori_loop(0, S - 1, back_body, (path0, best_last))
    path_ref[...] = path.reshape(1, 1, S)


def crf_loss_and_decode(emissions, y, lengths, trans, transT, start, end):
    B, S, T = emissions.shape
    y = y.astype(jnp.int32)
    y_prev = jnp.roll(y, shift=1, axis=1)       # y[t-1]; wrapped row 0 is masked
    y3 = y.reshape(B, S, 1)
    yp3 = y_prev.reshape(B, S, 1)

    loss_b, path = pl.pallas_call(
        _crf_kernel,
        out_shape=(
            jax.ShapeDtypeStruct((B, 1, 1), jnp.float32),
            jax.ShapeDtypeStruct((B, 1, S), jnp.int32),
        ),
        grid_spec=pltpu.PrefetchScalarGridSpec(
            num_scalar_prefetch=1,            # lengths (B,) in SMEM
            grid=(B,),
            in_specs=[
                pl.BlockSpec((pl.Squeezed(), S, T), lambda b, lens: (b, 0, 0)),
                pl.BlockSpec((pl.Squeezed(), S, 1), lambda b, lens: (b, 0, 0)),
                pl.BlockSpec((pl.Squeezed(), S, 1), lambda b, lens: (b, 0, 0)),
                pl.BlockSpec((T, T), lambda b, lens: (0, 0)),
                pl.BlockSpec((T, T), lambda b, lens: (0, 0)),
                pl.BlockSpec((1, T), lambda b, lens: (0, 0)),
                pl.BlockSpec((1, T), lambda b, lens: (0, 0)),
            ],
            out_specs=[
                pl.BlockSpec((1, 1, 1), lambda b, lens: (b, 0, 0)),
                pl.BlockSpec((1, 1, S), lambda b, lens: (b, 0, 0)),
            ],
            scratch_shapes=[pltpu.VMEM((S, T), jnp.int32)],   # backpointers
        ),
        compiler_params=pltpu.CompilerParams(dimension_semantics=("parallel",)),
    )(lengths, emissions, y3, yp3, trans, transT, start, end)
    return loss_b.reshape(B), path.reshape(B, S)


# -----------------------------------------------------------------------------
# Model wrapper (parameter setup + glue in plain JAX, compute in Pallas)
# -----------------------------------------------------------------------------
class XLModelPallas:
    def __init__(self, key, vocab_size, emb_dim, d_model, tag_num):
        self.d_model = d_model
        self.tag_num = tag_num
        self.hidden = 2 * d_model
        self.tag_pad = max(128, _round_up(tag_num, 128))   # lane-dense tag dim
        ks = jax.random.split(key, 8)
        scale = 0.1
        emb = scale * jax.random.normal(ks[0], (vocab_size, emb_dim), jnp.float32)
        w_enc = scale * jax.random.normal(ks[1], (emb_dim, self.hidden), jnp.float32)
        self.b_enc = scale * jax.random.normal(ks[2], (1, self.hidden), jnp.float32)
        w_tag = scale * jax.random.normal(ks[3], (self.hidden, tag_num), jnp.float32)
        b_tag = scale * jax.random.normal(ks[4], (1, tag_num), jnp.float32)
        trans = scale * jax.random.normal(ks[5], (tag_num, tag_num), jnp.float32)
        self.trans = trans                                  # trans[i, j] = i -> j
        self.transT = jnp.transpose(trans)
        self.start = scale * jax.random.normal(ks[6], (1, tag_num), jnp.float32)
        self.end = scale * jax.random.normal(ks[7], (1, tag_num), jnp.float32)

        # bf16 copies for MXU inputs (f32 accumulation in-kernel); tag axis of
        # the emission projection padded once, at init, to a multiple of 128.
        self.embedding_bf16 = emb.astype(jnp.bfloat16)
        self.w_enc_bf16 = w_enc.astype(jnp.bfloat16)
        wp = jnp.zeros((self.hidden, self.tag_pad), jnp.float32).at[:, :tag_num].set(w_tag)
        bp = jnp.zeros((1, self.tag_pad), jnp.float32).at[:, :tag_num].set(b_tag)
        self.w_tag_pad_bf16 = wp.astype(jnp.bfloat16)
        self.b_tag_pad = bp

    def __call__(self, src, y, mask):
        """src, y, mask: (B, S). mask==True marks padding (reverse_mask in torch)."""
        B, S = src.shape
        valid = jnp.logical_not(mask)
        lengths = jnp.sum(valid, axis=-1).astype(jnp.int32)

        emb = self.embedding_bf16[src]                      # (B, S, E) gather (glue)

        # Fused encoder + emission projection in one Pallas kernel.
        # TODO(synk): the torch model fills padded feature_vec rows with
        # torch.randn; those rows are masked inside the CRF and never affect
        # (loss, path), so the random fill is dropped rather than materialized.
        emissions = fused_projection(
            emb.reshape(B * S, -1), self.w_enc_bf16, self.b_enc,
            self.w_tag_pad_bf16, self.b_tag_pad, self.tag_num)
        emissions = emissions.reshape(B, S, self.tag_num)

        loss_b, path = crf_loss_and_decode(
            emissions, y, lengths, self.trans, self.transT, self.start, self.end)
        loss = jnp.mean(loss_b)
        return loss, path


# -----------------------------------------------------------------------------
if __name__ == "__main__":
    key = jax.random.PRNGKey(0)
    k_model, k_src, k_y = jax.random.split(key, 3)

    B, S = 2, 8
    vocab_size, emb_dim, d_model, tag_num = 50, 32, 16, 5

    model = XLModelPallas(k_model, vocab_size, emb_dim, d_model, tag_num)

    src = jax.random.randint(k_src, (B, S), 2, vocab_size, dtype=jnp.int32)
    y = jax.random.randint(k_y, (B, S), 0, tag_num, dtype=jnp.int32)
    lengths = jnp.array([6, 4], dtype=jnp.int32)
    # mask == True means padding (so reverse_mask = ~mask marks valid tokens)
    mask = jnp.arange(S)[None, :] >= lengths[:, None]

    loss, path = model(src, y, mask)
    jax.block_until_ready((loss, path))
    print("KERNEL_OK")
</pallas_src>

<mosaic_0001>
module attributes {stable_mosaic.version = 11 : i64} {
  func.func @_fused_proj_kernel(%arg0: i32, %arg1: memref<16x32xbf16, #tpu.memory_space<vmem>>, %arg2: memref<32x32xbf16, #tpu.memory_space<vmem>>, %arg3: memref<1x32xf32, #tpu.memory_space<vmem>>, %arg4: memref<32x128xbf16, #tpu.memory_space<vmem>>, %arg5: memref<1x128xf32, #tpu.memory_space<vmem>>, %arg6: memref<16x128xf32, #tpu.memory_space<vmem>>) attributes {dimension_semantics = [#tpu.dimension_semantics<parallel>], iteration_bounds = array<i64: 1>, scalar_prefetch = 0 : i64, scratch_operands = 0 : i64, tpu.core_type = #tpu.core_type<tc>, window_params = [{transform_indices = @transform_0, window_bounds = array<i64: 16, 32>}, {pipeline_mode = #tpu.pipeline_mode<synchronous>, transform_indices = @transform_1, window_bounds = array<i64: 32, 32>}, {pipeline_mode = #tpu.pipeline_mode<synchronous>, transform_indices = @transform_2, window_bounds = array<i64: 1, 32>}, {pipeline_mode = #tpu.pipeline_mode<synchronous>, transform_indices = @transform_3, window_bounds = array<i64: 32, 128>}, {pipeline_mode = #tpu.pipeline_mode<synchronous>, transform_indices = @transform_4, window_bounds = array<i64: 1, 128>}, {transform_indices = @transform_5, window_bounds = array<i64: 16, 128>}]} {
    %c0 = arith.constant 0 : index
    %c0_0 = arith.constant 0 : index
    %0 = vector.load %arg1[%c0, %c0_0] : memref<16x32xbf16, #tpu.memory_space<vmem>>, vector<16x32xbf16>
    %c0_1 = arith.constant 0 : index
    %c0_2 = arith.constant 0 : index
    %1 = vector.load %arg2[%c0_1, %c0_2] : memref<32x32xbf16, #tpu.memory_space<vmem>>, vector<32x32xbf16>
    %cst = arith.constant dense<0.000000e+00> : vector<16x32xf32>
    %2 = tpu.matmul %0, %1, %cst {dimension_numbers = #tpu.dot_dimension_numbers<[1], [0], [0], [1], [0, 0, 1, 1], [], []>} : vector<16x32xbf16>, vector<32x32xbf16>, vector<16x32xf32> -> vector<16x32xf32>
    %c0_3 = arith.constant 0 : index
    %c0_4 = arith.constant 0 : index
    %3 = vector.load %arg3[%c0_3, %c0_4] : memref<1x32xf32, #tpu.memory_space<vmem>>, vector<1x32xf32>
    %4 = vector.broadcast %3 : vector<1x32xf32> to vector<16x32xf32>
    %5 = arith.addf %2, %4 : vector<16x32xf32>
    %6 = math.tanh %5 : vector<16x32xf32>
    %7 = arith.truncf %6 : vector<16x32xf32> to vector<16x32xbf16>
    %c0_5 = arith.constant 0 : index
    %c0_6 = arith.constant 0 : index
    %8 = vector.load %arg4[%c0_5, %c0_6] : memref<32x128xbf16, #tpu.memory_space<vmem>>, vector<32x128xbf16>
    %cst_7 = arith.constant dense<0.000000e+00> : vector<16x128xf32>
    %9 = tpu.matmul %7, %8, %cst_7 {dimension_numbers = #tpu.dot_dimension_numbers<[1], [0], [0], [1], [0, 0, 1, 1], [], []>} : vector<16x32xbf16>, vector<32x128xbf16>, vector<16x128xf32> -> vector<16x128xf32>
    %c0_8 = arith.constant 0 : index
    %c0_9 = arith.constant 0 : index
    %10 = vector.load %arg5[%c0_8, %c0_9] : memref<1x128xf32, #tpu.memory_space<vmem>>, vector<1x128xf32>
    %11 = vector.broadcast %10 : vector<1x128xf32> to vector<16x128xf32>
    %12 = arith.addf %9, %11 : vector<16x128xf32>
    %c0_10 = arith.constant 0 : index
    %c0_11 = arith.constant 0 : index
    %13 = vector.load %arg6[%c0_10, %c0_11] : memref<16x128xf32, #tpu.memory_space<vmem>>, vector<16x128xf32>
    tpu.vector_store %arg6[%c0_10, %c0_11], %12 {strides = array<i32>} : memref<16x128xf32, #tpu.memory_space<vmem>>, vector<16x128xf32>,
    return
  }
  func.func @transform_0(%arg0: i32) -> (i32, i32) {
    %c0_i32 = arith.constant 0 : i32
    %c0_i32_0 = arith.constant 0 : i32
    return %arg0, %c0_i32 : i32, i32
  }
  func.func @transform_1(%arg0: i32) -> (i32, i32) {
    %c0_i32 = arith.constant 0 : i32
    %c0_i32_0 = arith.constant 0 : i32
    %c0_i32_1 = arith.constant 0 : i32
    return %c0_i32, %c0_i32_0 : i32, i32
  }
  func.func @transform_2(%arg0: i32) -> (i32, i32) {
    %c0_i32 = arith.constant 0 : i32
    %c0_i32_0 = arith.constant 0 : i32
    %c0_i32_1 = arith.constant 0 : i32
    return %c0_i32, %c0_i32_0 : i32, i32
  }
  func.func @transform_3(%arg0: i32) -> (i32, i32) {
    %c0_i32 = arith.constant 0 : i32
    %c0_i32_0 = arith.constant 0 : i32
    %c0_i32_1 = arith.constant 0 : i32
    return %c0_i32, %c0_i32_0 : i32, i32
  }
  func.func @transform_4(%arg0: i32) -> (i32, i32) {
    %c0_i32 = arith.constant 0 : i32
    %c0_i32_0 = arith.constant 0 : i32
    %c0_i32_1 = arith.constant 0 : i32
    return %c0_i32, %c0_i32_0 : i32, i32
  }
  func.func @transform_5(%arg0: i32) -> (i32, i32) {
    %c0_i32 = arith.constant 0 : i32
    %c0_i32_0 = arith.constant 0 : i32
    return %arg0, %c0_i32 : i32, i32
  }
}

</mosaic_0001>

<llo_original>
// kernel: tpu_custom_call.1
$region0: #{tpu_custom_call.1}
  #allocation0 [shape = 'u32[]', space=smem, size = 0x4, offset = 0x4, fixed_abs, tag = 'smem constant byte address 0x4 - core index']
  #allocation1 [shape = 'u32[144,128]{1,0:T(1,128)}', space=vmem, size = 0x12000, scoped, tag = 'internal scratch']
  %s0 = inlined_call_operand.hbm [shape: bf16[16,32], index: 0, kind: input, shape index: {}]
  %s1 = inlined_call_operand.hbm [shape: bf16[32,32], index: 1, kind: input, shape index: {}]
  %s2 = inlined_call_operand.vmem [shape: f32[1,32], index: 2, kind: input, shape index: {}]
  %s3 = inlined_call_operand.hbm [shape: bf16[32,128], index: 3, kind: input, shape index: {}]
  %s4 = inlined_call_operand.vmem [shape: f32[1,128], index: 4, kind: input, shape index: {}]
  %s5 = inlined_call_operand.hbm [shape: f32[16,128], index: 5, kind: output, shape index: {}]
  %s6 = sld [smem:[#allocation0]]
  $region42: #{tpu_custom_call.1} parent=0
    _
  %s8 = ssub.s32 1, %s6
  %s9 = scalar_select 0, %s8, %s6
  $region1: #{tpu_custom_call.1} parent=0
    #allocation2 [shape = 'u8[4096]{0}', space=vmem, size = 0x1000, scoped, tag = 'input window, operand 0, single buffered']
    #allocation3 [shape = 's32[1]{0}', space=sflag, size = 0x4, scoped, tag = 'scoped memory for tpu_custom_call.1']
    #allocation4 [shape = 's32[1]{0}', space=sflag, size = 0x4, scoped, tag = 'scoped memory for tpu_custom_call.1']
    #allocation5 [shape = 'u8[8192]{0}', space=vmem, size = 0x2000, scoped, tag = 'input window, operand 1, single buffered']
    #allocation6 [shape = 's32[1]{0}', space=sflag, size = 0x4, scoped, tag = 'scoped memory for tpu_custom_call.1']
    #allocation7 [shape = 'u8[8192]{0}', space=vmem, size = 0x2000, scoped, tag = 'input window, operand 3, single buffered']
    #allocation8 [shape = 'u8[8192]{0}', space=vmem, size = 0x2000, scoped, tag = 'output window, operand 0, single buffered']
    %10 = vsyncpa [#allocation3], 0
    %11 = vsyncpa [#allocation6], 0
    %12 = vsyncpa [#allocation4], 0
    // Predicated region
    $region2: #{tpu_custom_call.1} parent=1 // pred_check
      _
    $region3: #{tpu_custom_call.1} parent=1 // pred_check_branch
      %14 = sbr.rel (0) target = $region5
    $region4: #{tpu_custom_call.1} parent=1 // pred_region
      %s16 = ssub.s32 128, 128
      %17 = vsyncadd [#allocation3], %s16
      %s18 = sshll.u32 [#allocation2], 4
      %s19 = int_to_ptr.vmem [resolvable:$true] %s18
      %24 = dma.hbm_to_vmem [thread:$0]  %s0, 128, %s19, [#allocation3], 64, 64, 4
    $region5: #{tpu_custom_call.1} parent=1 // pred_fallthru
      _
    // Predicated region
    $region6: #{tpu_custom_call.1} parent=1 // pred_check
      _
    $region7: #{tpu_custom_call.1} parent=1 // pred_check_branch
      %26 = sbr.rel (0) target = $region9
    $region8: #{tpu_custom_call.1} parent=1 // pred_region
      %s28 = ssub.s32 256, 256
      %29 = vsyncadd [#allocation6], %s28
      %s30 = sshll.u32 [#allocation5], 4
      %s31 = int_to_ptr.vmem [resolvable:$true] %s30
      %36 = dma.hbm_to_vmem [thread:$0]  %s1, 256, %s31, [#allocation6], 64, 64, 4
    $region9: #{tpu_custom_call.1} parent=1 // pred_fallthru
      _
    // Predicated region
    $region10: #{tpu_custom_call.1} parent=1 // pred_check
      _
    $region11: #{tpu_custom_call.1} parent=1 // pred_check_branch
      %38 = sbr.rel (0) target = $region13
    $region12: #{tpu_custom_call.1} parent=1 // pred_region
      _
    $region13: #{tpu_custom_call.1} parent=1 // pred_fallthru
      _
    // Predicated region
    $region14: #{tpu_custom_call.1} parent=1 // pred_check
      _
    $region15: #{tpu_custom_call.1} parent=1 // pred_check_branch
      %40 = sbr.rel (0) target = $region17
    $region16: #{tpu_custom_call.1} parent=1 // pred_region
      %s42 = ssub.s32 256, 256
      %43 = vsyncadd [#allocation6], %s42
      %s44 = sshll.u32 [#allocation7], 4
      %s45 = int_to_ptr.vmem [resolvable:$true] %s44
      %50 = dma.hbm_to_vmem [thread:$0]  %s3, 256, %s45, [#allocation6], 64, 64, 4
    $region17: #{tpu_custom_call.1} parent=1 // pred_fallthru
      _
    // Predicated region
    $region18: #{tpu_custom_call.1} parent=1 // pred_check
      _
    $region19: #{tpu_custom_call.1} parent=1 // pred_check_branch
      %52 = sbr.rel (0) target = $region21
    $region20: #{tpu_custom_call.1} parent=1 // pred_region
      _
    $region21: #{tpu_custom_call.1} parent=1 // pred_fallthru
      _
    // Predicated region
    $region22: #{tpu_custom_call.1} parent=1 // pred_check
      _
    $region23: #{tpu_custom_call.1} parent=1 // pred_check_branch
      %54 = sbr.rel (0) target = $region25
    $region24: #{tpu_custom_call.1} parent=1 // pred_region
      %55 = dma.done [#allocation3], 128
    $region25: #{tpu_custom_call.1} parent=1 // pred_fallthru
      _
    // Predicated region
    $region26: #{tpu_custom_call.1} parent=1 // pred_check
      _
    $region27: #{tpu_custom_call.1} parent=1 // pred_check_branch
      %57 = sbr.rel (0) target = $region29
    $region28: #{tpu_custom_call.1} parent=1 // pred_region
      %58 = dma.done [#allocation6], 256
    $region29: #{tpu_custom_call.1} parent=1 // pred_fallthru
      _
    // Predicated region
    $region30: #{tpu_custom_call.1} parent=1 // pred_check
      _
    $region31: #{tpu_custom_call.1} parent=1 // pred_check_branch
      %60 = sbr.rel (0) target = $region33
    $region32: #{tpu_custom_call.1} parent=1 // pred_region
      %61 = dma.done [#allocation6], 256
    $region33: #{tpu_custom_call.1} parent=1 // pred_fallthru
      _
    %v63 = vld [vmem:[#allocation2] sm:$0xf]
    %v64 = vld [vmem:[#allocation2 + $0x4] sm:$0xf]
    %v65 = vld [vmem:[#allocation5] sm:$0xf]
    %v66 = vld [vmem:[#allocation5 + $0x4] sm:$0xf]
    %v67 = vld [vmem:[#allocation5 + $0x8] sm:$0xf]
    %v68 = vld [vmem:[#allocation5 + $0xc] sm:$0xf]
    %v69 = vld [vmem:[%s2] sm:$0x1]
    %v71 = vlaneseq
    %v72 = vshrl.u32 %v71, 7
    %v73 = vsub.s32 0, %v72
    %v74 = vrot.slane %v69, %v73
    %v78 = vunpack.c.l.b16 %v63
    %v79 = vunpack.c.l.b16 %v64
    %v80 = vpack.c.b16 %v79, %v78
    %v85 = vunpack.c.l.b16 %v65
    %v86 = vunpack.c.l.b16 %v66
    %v87 = vunpack.c.l.b16 %v67
    %v88 = vunpack.c.l.b16 %v68
    %v89 = vpack.c.b16 %v86, %v85
    %v90 = vpack.c.b16 %v88, %v87
    %vm93 = vcmask 261120
    %v95 = vsel %vm93, %v80, 0
    %97 = vmatprep.subr.bf16.mxu0 0
    %98 = vmatpush1.bf16.msra.mxu0 0
    %99 = vmatprep.subr.bf16.mxu0 0
    %100 = vmatpush1.bf16.msra.mxu0 0
    %101 = vmatprep.subr.bf16.mxu0 0
    %102 = vmatpush1.bf16.msra.mxu0 0
    %103 = vmatprep.subr.bf16.mxu0 0
    %104 = vmatpush1.bf16.msra.mxu0 0
    %105 = vmatprep.subr.bf16.mxu0 0
    %106 = vmatpush1.bf16.msra.mxu0 0
    %107 = vmatprep.subr.bf16.mxu0 0
    %108 = vmatpush1.bf16.msra.mxu0 0
    %109 = vmatprep.subr.bf16.mxu0 0
    %110 = vmatpush1.bf16.msra.mxu0 %v90
    %111 = vmatprep.subr.bf16.mxu0 0
    %112 = vmatpush1.bf16.msra.mxu0 %v89
    %113 = vmatprep.subr.bf16.mxu0 0
    %114 = vmatpush2.bf16.msra.mxu0 0
    %115 = vmatprep.subr.bf16.mxu0 0
    %116 = vmatpush2.bf16.msra.mxu0 0
    %117 = vmatprep.subr.bf16.mxu0 0
    %118 = vmatpush2.bf16.msra.mxu0 0
    %119 = vmatprep.subr.bf16.mxu0 0
    %120 = vmatpush2.bf16.msra.mxu0 0
    %121 = vmatprep.subr.bf16.mxu0 0
    %122 = vmatpush2.bf16.msra.mxu0 0
    %123 = vmatprep.subr.bf16.mxu0 0
    %124 = vmatpush2.bf16.msra.mxu0 0
    %125 = vmatprep.subr.bf16.mxu0 0
    %126 = vmatpush2.bf16.msra.mxu0 0
    %127 = vmatprep.subr.bf16.mxu0 0
    %128 = vmatpush2.bf16.msra.mxu0 0
    %129 = vmatprep.mubr.bf16.mxu0 0
    %130 = vmatmul.mubr.bf16.gmra.mxu0 %v95
    %v131 = vpop.f32.mrf.mxu0
    %v132 = vadd.f32 %v74, %v131
    %v133 = vpop.f32.mrf.mxu0
    %v134 = vpop.f32.mrf.mxu0
    %v135 = vadd.f32 %v74, %v134
    %v136 = vpop.f32.mrf.mxu0
    %137 = vdwg.mxu0
    %v138 = vtanh.pop %v132
    %v139 = vtanh.pop %v135
    %v140 = vpack.c.bf16 %v139, %v138
    %v141 = vld [vmem:[#allocation7] sm:$0xf]
    %v142 = vld [vmem:[#allocation7 + $0x4] sm:$0xf]
    %v143 = vld [vmem:[#allocation7 + $0x8] sm:$0xf]
    %v144 = vld [vmem:[#allocation7 + $0xc] sm:$0xf]
    %v145 = vld [vmem:[%s4] sm:$0x1]
    %v147 = vlaneseq
    %v148 = vshrl.u32 %v147, 7
    %v149 = vsub.s32 0, %v148
    %v150 = vrot.slane %v145, %v149
    %v156 = vunpack.c.l.b16 %v141
    %v157 = vunpack.c.l.b16 %v142
    %v158 = vunpack.c.l.b16 %v143
    %v159 = vunpack.c.l.b16 %v144
    %v160 = vpack.c.b16 %v157, %v156
    %v161 = vpack.c.b16 %v159, %v158
    %v165 = vsel %vm93, %v140, 0
    %167 = vmatprep.subr.bf16.mxu0 0
    %168 = vmatpush1.bf16.msra.mxu0 0
    %169 = vmatprep.subr.bf16.mxu0 0
    %170 = vmatpush1.bf16.msra.mxu0 0
    %171 = vmatprep.subr.bf16.mxu0 0
    %172 = vmatpush1.bf16.msra.mxu0 0
    %173 = vmatprep.subr.bf16.mxu0 0
    %174 = vmatpush1.bf16.msra.mxu0 0
    %175 = vmatprep.subr.bf16.mxu0 0
    %176 = vmatpush1.bf16.msra.mxu0 0
    %177 = vmatprep.subr.bf16.mxu0 0
    %178 = vmatpush1.bf16.msra.mxu0 0
    %179 = vmatprep.subr.bf16.mxu0 0
    %180 = vmatpush1.bf16.msra.mxu0 %v161
    %181 = vmatprep.subr.bf16.mxu0 0
    %182 = vmatpush1.bf16.msra.mxu0 %v160
    %183 = vmatprep.subr.bf16.mxu0 0
    %184 = vmatpush2.bf16.msra.mxu0 0
    %185 = vmatprep.subr.bf16.mxu0 0
    %186 = vmatpush2.bf16.msra.mxu0 0
    %187 = vmatprep.subr.bf16.mxu0 0
    %188 = vmatpush2.bf16.msra.mxu0 0
    %189 = vmatprep.subr.bf16.mxu0 0
    %190 = vmatpush2.bf16.msra.mxu0 0
    %191 = vmatprep.subr.bf16.mxu0 0
    %192 = vmatpush2.bf16.msra.mxu0 0
    %193 = vmatprep.subr.bf16.mxu0 0
    %194 = vmatpush2.bf16.msra.mxu0 0
    %195 = vmatprep.subr.bf16.mxu0 0
    %196 = vmatpush2.bf16.msra.mxu0 0
    %197 = vmatprep.subr.bf16.mxu0 0
    %198 = vmatpush2.bf16.msra.mxu0 0
    %199 = vmatprep.mubr.bf16.mxu0 0
    %200 = vmatmul.mubr.bf16.gmra.mxu0 %v165
    %v201 = vpop.f32.mrf.mxu0
    %v202 = vadd.f32 %v150, %v201
    %v203 = vpop.f32.mrf.mxu0
    %v204 = vpop.f32.mrf.mxu0
    %v205 = vadd.f32 %v150, %v204
    %v206 = vpop.f32.mrf.mxu0
    %207 = vdwg.mxu0
    %208 = vst [vmem:[#allocation8] sm:$0xff] %v202
    %209 = vst [vmem:[#allocation8 + $0x8] sm:$0xff] %v205
    // Predicated region
    $region34: #{tpu_custom_call.1} parent=1 // pred_check
      _
    $region35: #{tpu_custom_call.1} parent=1 // pred_check_branch
      %211 = sbr.rel (0) target = $region37
    $region36: #{tpu_custom_call.1} parent=1 // pred_region
      %s213 = ssub.s32 256, 256
      %214 = vsyncadd [#allocation4], %s213
      %s215 = sshll.u32 [#allocation8], 4
      %s216 = int_to_ptr.vmem [resolvable:$true] %s215
      %221 = dma.vmem_to_hbm [thread:$0]  %s216, 256, %s5, [#allocation4], 128, 128, 8
    $region37: #{tpu_custom_call.1} parent=1 // pred_fallthru
      _
    // Predicated region
    $region38: #{tpu_custom_call.1} parent=1 // pred_check
      _
    $region39: #{tpu_custom_call.1} parent=1 // pred_check_branch
      %223 = sbr.rel (0) target = $region41
    $region40: #{tpu_custom_call.1} parent=1 // pred_region
      %224 = dma.done [#allocation4], 256
    $region41: #{tpu_custom_call.1} parent=1 // pred_fallthru
      _
    %225 = vsyncpa [#allocation3], 1
    %226 = vsyncpa [#allocation6], 1
    %227 = vsyncpa [#allocation4], 1

</llo_original>
